<compile_context>
chip_gen: v6e
topology: v6e:2x2x1
jax: 0.10.0
libtpu: 0.0.40
codegen_flags: <defaults>
</compile_context>

<pallas_src>
from functools import lru_cache, partial

import jax
import jax.numpy as jnp
from jax.experimental import pallas as pl
from jax.experimental.pallas import tpu as pltpu


_KRON_MAX_HW = 1024  # use the fused single-matmul path while the (H*W)^2 matrix stays small


def _box_matrix(n, r, dtype):
    """B[i, j] = 1 iff j lies in the boundary-clamped radius-r window of i."""
    idx = jnp.arange(n)
    return (jnp.abs(idx[:, None] - idx[None, :]) <= r).astype(dtype)


@lru_cache(maxsize=None)
def _vmem_capacity_bytes():
    try:
        return int(pltpu.get_tpu_info().vmem_capacity_bytes)
    except Exception:
        return 128 * 1024 * 1024  # v5e/v6e default


def _chip_params():
    """(num_tensorcores_guess, vmem_limit_bytes) derived from VMEM capacity.

    v7x has 64 MiB VMEM per TensorCore and 2 TCs/chip; v5e/v6e have 128 MiB and 1 TC.
    """
    cap = _vmem_capacity_bytes()
    n_tc = 2 if cap <= 96 * 1024 * 1024 else 1
    vmem_limit = min(int(cap * 3 // 4), 100 * 1024 * 1024)  # ~48 MiB v7x, ~96 MiB v5e/v6e
    return n_tc, vmem_limit


def _choose_plane_batch(nc, bytes_per_plane, budget, n_tc):
    """Planes per grid step: largest batch whose working set fits `budget`.

    On 1-TC chips prefer a single grid step (the grid is a serial loop there: extra
    steps only add fixed overhead).  On 2-TC chips prefer >= n_tc steps so the
    'parallel' axis can shard across cores, unless that would make the batch tiny.
    Multi-step batches are kept a multiple of 8 (sublane tiling); callers pad NC.
    """
    max_p = max(1, budget // max(bytes_per_plane, 1))
    if n_tc > 1:
        max_p = min(max_p, max(8, pl.cdiv(nc, n_tc)))
    if max_p >= nc:
        return nc  # single grid step, block == full array dims
    return max(8, (max_p // 8) * 8)


def _kron_kernel(x_ref, k_ref, o_ref):
    # x_ref: (P, H*W)   k_ref: (H*W, H*W)   o_ref: (P, H*W)
    # One lane-dense MXU matmul does both the H and W box passes at once.
    o_ref[...] = jnp.dot(
        x_ref[...].astype(k_ref.dtype), k_ref[...],
        preferred_element_type=jnp.float32,
    ).astype(o_ref.dtype)


def _two_pass_kernel(x_ref, bh_ref, bw_ref, o_ref):
    p, h, w = x_ref.shape
    bw = bw_ref[...]
    bh = bh_ref[...]
    # Column pass (box-sum along W / torch dim=3): fold the P planes into the matmul
    # M dimension -> one (P*H, W) @ (W, W) MXU matmul.
    t = jnp.dot(x_ref[...].reshape(p * h, w).astype(bw.dtype), bw,
                preferred_element_type=jnp.float32)
    # Cast down to the compute dtype BEFORE the transpose copy (cuts VMEM / copy bytes).
    t = t.astype(bh.dtype).reshape(p, h, w)
    # Row pass (box-sum along H / torch dim=2): B_H is symmetric, so run the matmul on
    # the transposed slab -> one (P*W, H) @ (H, H) MXU matmul.
    y = jnp.dot(jnp.swapaxes(t, 1, 2).reshape(p * w, h), bh,
                preferred_element_type=jnp.float32)
    # Cast to the output dtype BEFORE the final transpose copy.
    o_ref[...] = jnp.swapaxes(y.astype(o_ref.dtype).reshape(p, w, h), 1, 2)
    # TODO(synk): banded shift-add path (2r+1 pltpu.roll accumulations) for very large
    # planes on v5e, where the dense O(H+W)-per-pixel matmul leaves the HBM roofline.


@partial(jax.jit, static_argnames=("r",))
def box_filter(x, r):
    """Pallas implementation of BoxFilter(r).forward(x) for NCHW inputs."""
    assert x.ndim == 4
    n, c, h, w = x.shape
    assert h >= 2 * r + 1 and w >= 2 * r + 1, "radius too large for spatial dims"
    nc = n * c
    hw = h * w
    itemsize = x.dtype.itemsize
    compute_dtype = jnp.bfloat16 if x.dtype == jnp.bfloat16 else jnp.float32
    cbytes = jnp.dtype(compute_dtype).itemsize
    n_tc, vmem_limit = _chip_params()

    bh = _box_matrix(h, r, compute_dtype)
    bw = _box_matrix(w, r, compute_dtype)

    if hw <= _KRON_MAX_HW:
        # ---------- fused single-matmul path (lane-dense minor dim = H*W) ----------
        # K[(i,j),(i',j')] = B_H[i,i'] * B_W[j,j']  ==  kron(B_H, B_W), symmetric.
        kmat = (bh[:, None, :, None] * bw[None, :, None, :]).reshape(hw, hw)

        # Streamed bytes per plane: double-buffered x + out rows plus the f32
        # accumulator row; subtract a conservative 2x K footprint from the budget.
        per_plane = (2 * 2 * itemsize + 4) * hw
        budget = max(vmem_limit - 2 * hw * hw * cbytes, vmem_limit // 4)
        p = _choose_plane_batch(nc, per_plane, budget, n_tc)
        steps = pl.cdiv(nc, p)

        xf = x.reshape(nc, hw)
        if steps * p != nc:
            xf = jnp.pad(xf, ((0, steps * p - nc), (0, 0)))

        # K is grid-invariant: single-buffer it when the grid actually iterates.
        k_kwargs = {} if steps == 1 else {"pipeline_mode": pl.Buffered(1)}

        out = pl.pallas_call(
            _kron_kernel,
            out_shape=jax.ShapeDtypeStruct((steps * p, hw), x.dtype),
            grid_spec=pltpu.PrefetchScalarGridSpec(
                num_scalar_prefetch=0,
                grid=(steps,),
                in_specs=[
                    pl.BlockSpec((p, hw), lambda b: (b, 0)),
                    pl.BlockSpec((hw, hw), lambda b: (0, 0), **k_kwargs),
                ],
                out_specs=pl.BlockSpec((p, hw), lambda b: (b, 0)),
            ),
            compiler_params=pltpu.CompilerParams(
                dimension_semantics=("parallel",),
                vmem_limit_bytes=vmem_limit,
            ),
            cost_estimate=pl.CostEstimate(
                flops=2 * steps * p * hw * hw,
                transcendentals=0,
                bytes_accessed=2 * nc * hw * itemsize + hw * hw * cbytes,
            ),
        )(xf, kmat)
        return out[:nc].reshape(n, c, h, w)

    # ---------- large-plane fallback: two MXU matmuls per plane batch ----------
    # Count double-buffered x/out tiles, the f32 column-pass slab, its compute-dtype
    # transposed copy and the output-dtype transposed result (review: intermediates).
    per_plane = (2 * 2 * itemsize + 4 + 2 * cbytes + itemsize) * hw
    b_bytes = (h * h + w * w) * cbytes
    budget = max(vmem_limit - 2 * b_bytes, vmem_limit // 4)
    p = _choose_plane_batch(nc, per_plane, budget, n_tc)
    steps = pl.cdiv(nc, p)

    xf = x.reshape(nc, h, w)
    if steps * p != nc:
        xf = jnp.pad(xf, ((0, steps * p - nc), (0, 0), (0, 0)))

    b_kwargs = {} if steps == 1 else {"pipeline_mode": pl.Buffered(1)}

    out = pl.pallas_call(
        _two_pass_kernel,
        out_shape=jax.ShapeDtypeStruct((steps * p, h, w), x.dtype),
        grid_spec=pltpu.PrefetchScalarGridSpec(
            num_scalar_prefetch=0,
            grid=(steps,),
            in_specs=[
                pl.BlockSpec((p, h, w), lambda b: (b, 0, 0)),
                pl.BlockSpec((h, h), lambda b: (0, 0), **b_kwargs),
                pl.BlockSpec((w, w), lambda b: (0, 0), **b_kwargs),
            ],
            out_specs=pl.BlockSpec((p, h, w), lambda b: (b, 0, 0)),
        ),
        compiler_params=pltpu.CompilerParams(
            dimension_semantics=("parallel",),
            vmem_limit_bytes=vmem_limit,
        ),
        cost_estimate=pl.CostEstimate(
            flops=2 * steps * p * hw * (h + w),
            transcendentals=0,
            bytes_accessed=2 * nc * hw * itemsize + b_bytes,
        ),
    )(xf, bh, bw)
    return out[:nc].reshape(n, c, h, w)


def box_filter_ref(x, r):
    """Pure-JAX reference mirroring the torch cumsum/diff implementation."""
    def diff_x(v):
        left = v[:, :, r:2 * r + 1]
        middle = v[:, :, 2 * r + 1:] - v[:, :, :-2 * r - 1]
        right = v[:, :, -1:] - v[:, :, -2 * r - 1:-r - 1]
        return jnp.concatenate([left, middle, right], axis=2)

    def diff_y(v):
        left = v[:, :, :, r:2 * r + 1]
        middle = v[:, :, :, 2 * r + 1:] - v[:, :, :, :-2 * r - 1]
        right = v[:, :, :, -1:] - v[:, :, :, -2 * r - 1:-r - 1]
        return jnp.concatenate([left, middle, right], axis=3)

    return diff_y(jnp.cumsum(diff_x(jnp.cumsum(x, axis=2)), axis=3))


if __name__ == "__main__":
    key = jax.random.PRNGKey(0)
    N, C, H, W = 2, 4, 16, 16
    r = 2  # BoxFilter radius (the module's only parameter)

    x = jax.random.normal(key, (N, C, H, W), dtype=jnp.float32)

    y = jax.block_until_ready(box_filter(x, r=r))
    y_ref = box_filter_ref(x, r)
    assert y.shape == (N, C, H, W)
    assert jnp.allclose(y, y_ref, atol=1e-4, rtol=1e-4), "f32 mismatch vs reference"

    # bf16 path: kernel keeps bf16 on the MXU with exact f32 accumulation; compare
    # against the f32 box-sum of the (already bf16-rounded) input, loose tolerance.
    xb = x.astype(jnp.bfloat16)
    yb = jax.block_until_ready(box_filter(xb, r=r))
    yb_ref = box_filter_ref(xb.astype(jnp.float32), r)
    assert jnp.allclose(yb.astype(jnp.float32), yb_ref, atol=0.25, rtol=0.05), \
        "bf16 mismatch vs reference"

    print("KERNEL_OK")
</pallas_src>

<mosaic_0001>
module attributes {stable_mosaic.version = 11 : i64} {
  func.func @_kron_kernel(%arg0: i32, %arg1: memref<8x256xf32, #tpu.memory_space<vmem>>, %arg2: memref<256x256xf32, #tpu.memory_space<vmem>>, %arg3: memref<8x256xf32, #tpu.memory_space<vmem>>) attributes {dimension_semantics = [#tpu.dimension_semantics<parallel>], iteration_bounds = array<i64: 1>, scalar_prefetch = 0 : i64, scratch_operands = 0 : i64, tpu.core_type = #tpu.core_type<tc>, window_params = [{transform_indices = @transform_0, window_bounds = array<i64: 8, 256>}, {pipeline_mode = #tpu.pipeline_mode<synchronous>, transform_indices = @transform_1, window_bounds = array<i64: 256, 256>}, {transform_indices = @transform_2, window_bounds = array<i64: 8, 256>}]} {
    %c0 = arith.constant 0 : index
    %c0_0 = arith.constant 0 : index
    %0 = vector.load %arg1[%c0, %c0_0] : memref<8x256xf32, #tpu.memory_space<vmem>>, vector<8x256xf32>
    %c0_1 = arith.constant 0 : index
    %c0_2 = arith.constant 0 : index
    %1 = vector.load %arg2[%c0_1, %c0_2] : memref<256x256xf32, #tpu.memory_space<vmem>>, vector<256x256xf32>
    %cst = arith.constant dense<0.000000e+00> : vector<8x256xf32>
    %2 = tpu.matmul %0, %1, %cst {dimension_numbers = #tpu.dot_dimension_numbers<[1], [0], [0], [1], [0, 0, 1, 1], [], []>} : vector<8x256xf32>, vector<256x256xf32>, vector<8x256xf32> -> vector<8x256xf32>
    %c0_3 = arith.constant 0 : index
    %c0_4 = arith.constant 0 : index
    %3 = vector.load %arg3[%c0_3, %c0_4] : memref<8x256xf32, #tpu.memory_space<vmem>>, vector<8x256xf32>
    tpu.vector_store %arg3[%c0_3, %c0_4], %2 {strides = array<i32>} : memref<8x256xf32, #tpu.memory_space<vmem>>, vector<8x256xf32>,
    return
  }
  func.func @transform_0(%arg0: i32) -> (i32, i32) {
    %c0_i32 = arith.constant 0 : i32
    %c0_i32_0 = arith.constant 0 : i32
    return %arg0, %c0_i32 : i32, i32
  }
  func.func @transform_1(%arg0: i32) -> (i32, i32) {
    %c0_i32 = arith.constant 0 : i32
    %c0_i32_0 = arith.constant 0 : i32
    %c0_i32_1 = arith.constant 0 : i32
    return %c0_i32, %c0_i32_0 : i32, i32
  }
  func.func @transform_2(%arg0: i32) -> (i32, i32) {
    %c0_i32 = arith.constant 0 : i32
    %c0_i32_0 = arith.constant 0 : i32
    return %arg0, %c0_i32 : i32, i32
  }
}

</mosaic_0001>

<llo_original>
// kernel: box_filter.1
$region0: #{box_filter.1}
  #allocation0 [shape = 'u32[]', space=smem, size = 0x4, offset = 0x4, fixed_abs, tag = 'smem constant byte address 0x4 - core index']
  #allocation1 [shape = 'u32[144,128]{1,0:T(1,128)}', space=vmem, size = 0x12000, scoped, tag = 'internal scratch']
  %s0 = inlined_call_operand.vmem [shape: f32[8,256], index: 0, kind: input, shape index: {}]
  %s1 = inlined_call_operand.vmem [shape: f32[256,256], index: 1, kind: input, shape index: {}]
  %s2 = inlined_call_operand.vmem [shape: f32[8,256], index: 2, kind: output, shape index: {}]
  %s3 = sld [smem:[#allocation0]]
  $region18: #{box_filter.1} parent=0
    _
  %s5 = ssub.s32 1, %s3
  %s6 = scalar_select 0, %s5, %s3
  // Predicated region
  $region2: #{box_filter.1} parent=0 // pred_check
    _
  $region3: #{box_filter.1} parent=0 // pred_check_branch
    %8 = sbr.rel (0) target = $region5
  $region4: #{box_filter.1} parent=0 // pred_region
    _
  $region5: #{box_filter.1} parent=0 // pred_fallthru
    _
  // Predicated region
  $region6: #{box_filter.1} parent=0 // pred_check
    _
  $region7: #{box_filter.1} parent=0 // pred_check_branch
    %10 = sbr.rel (0) target = $region9
  $region8: #{box_filter.1} parent=0 // pred_region
    _
  $region9: #{box_filter.1} parent=0 // pred_fallthru
    _
  %v11 = vld [vmem:[%s0] sm:$0xff]
  %v12 = vld [vmem:[%s0 + $0x8] sm:$0xff]
  %v13 = vld [vmem:[%s1] sm:$0xff]
  %v14 = vld [vmem:[%s1 + $0x8] sm:$0xff]
  %v15 = vld [vmem:[%s1 + $0x10] sm:$0xff]
  %v16 = vld [vmem:[%s1 + $0x18] sm:$0xff]
  %v17 = vld [vmem:[%s1 + $0x20] sm:$0xff]
  %v18 = vld [vmem:[%s1 + $0x28] sm:$0xff]
  %v19 = vld [vmem:[%s1 + $0x30] sm:$0xff]
  %v20 = vld [vmem:[%s1 + $0x38] sm:$0xff]
  %v21 = vld [vmem:[%s1 + $0x40] sm:$0xff]
  %v22 = vld [vmem:[%s1 + $0x48] sm:$0xff]
  %v23 = vld [vmem:[%s1 + $0x50] sm:$0xff]
  %v24 = vld [vmem:[%s1 + $0x58] sm:$0xff]
  %v25 = vld [vmem:[%s1 + $0x60] sm:$0xff]
  %v26 = vld [vmem:[%s1 + $0x68] sm:$0xff]
  %v27 = vld [vmem:[%s1 + $0x70] sm:$0xff]
  %v28 = vld [vmem:[%s1 + $0x78] sm:$0xff]
  %v29 = vld [vmem:[%s1 + $0x80] sm:$0xff]
  %v30 = vld [vmem:[%s1 + $0x88] sm:$0xff]
  %v31 = vld [vmem:[%s1 + $0x90] sm:$0xff]
  %v32 = vld [vmem:[%s1 + $0x98] sm:$0xff]
  %v33 = vld [vmem:[%s1 + $0xa0] sm:$0xff]
  %v34 = vld [vmem:[%s1 + $0xa8] sm:$0xff]
  %v35 = vld [vmem:[%s1 + $0xb0] sm:$0xff]
  %v36 = vld [vmem:[%s1 + $0xb8] sm:$0xff]
  %v37 = vld [vmem:[%s1 + $0xc0] sm:$0xff]
  %v38 = vld [vmem:[%s1 + $0xc8] sm:$0xff]
  %v39 = vld [vmem:[%s1 + $0xd0] sm:$0xff]
  %v40 = vld [vmem:[%s1 + $0xd8] sm:$0xff]
  %v41 = vld [vmem:[%s1 + $0xe0] sm:$0xff]
  %v42 = vld [vmem:[%s1 + $0xe8] sm:$0xff]
  %v43 = vld [vmem:[%s1 + $0xf0] sm:$0xff]
  %v44 = vld [vmem:[%s1 + $0xf8] sm:$0xff]
  %v45 = vld [vmem:[%s1 + $0x100] sm:$0xff]
  %v46 = vld [vmem:[%s1 + $0x108] sm:$0xff]
  %v47 = vld [vmem:[%s1 + $0x110] sm:$0xff]
  %v48 = vld [vmem:[%s1 + $0x118] sm:$0xff]
  %v49 = vld [vmem:[%s1 + $0x120] sm:$0xff]
  %v50 = vld [vmem:[%s1 + $0x128] sm:$0xff]
  %v51 = vld [vmem:[%s1 + $0x130] sm:$0xff]
  %v52 = vld [vmem:[%s1 + $0x138] sm:$0xff]
  %v53 = vld [vmem:[%s1 + $0x140] sm:$0xff]
  %v54 = vld [vmem:[%s1 + $0x148] sm:$0xff]
  %v55 = vld [vmem:[%s1 + $0x150] sm:$0xff]
  %v56 = vld [vmem:[%s1 + $0x158] sm:$0xff]
  %v57 = vld [vmem:[%s1 + $0x160] sm:$0xff]
  %v58 = vld [vmem:[%s1 + $0x168] sm:$0xff]
  %v59 = vld [vmem:[%s1 + $0x170] sm:$0xff]
  %v60 = vld [vmem:[%s1 + $0x178] sm:$0xff]
  %v61 = vld [vmem:[%s1 + $0x180] sm:$0xff]
  %v62 = vld [vmem:[%s1 + $0x188] sm:$0xff]
  %v63 = vld [vmem:[%s1 + $0x190] sm:$0xff]
  %v64 = vld [vmem:[%s1 + $0x198] sm:$0xff]
  %v65 = vld [vmem:[%s1 + $0x1a0] sm:$0xff]
  %v66 = vld [vmem:[%s1 + $0x1a8] sm:$0xff]
  %v67 = vld [vmem:[%s1 + $0x1b0] sm:$0xff]
  %v68 = vld [vmem:[%s1 + $0x1b8] sm:$0xff]
  %v69 = vld [vmem:[%s1 + $0x1c0] sm:$0xff]
  %v70 = vld [vmem:[%s1 + $0x1c8] sm:$0xff]
  %v71 = vld [vmem:[%s1 + $0x1d0] sm:$0xff]
  %v72 = vld [vmem:[%s1 + $0x1d8] sm:$0xff]
  %v73 = vld [vmem:[%s1 + $0x1e0] sm:$0xff]
  %v74 = vld [vmem:[%s1 + $0x1e8] sm:$0xff]
  %v75 = vld [vmem:[%s1 + $0x1f0] sm:$0xff]
  %v76 = vld [vmem:[%s1 + $0x1f8] sm:$0xff]
  %77 = vmatprep.subr.mxu0 %v44
  %78 = vmatpush1.msra.mxu0 %v43
  %79 = vmatprep.subr.mxu0 %v42
  %80 = vmatpush1.msra.mxu0 %v41
  %81 = vmatprep.subr.mxu0 %v40
  %82 = vmatpush1.msra.mxu0 %v39
  %83 = vmatprep.subr.mxu0 %v38
  %84 = vmatpush1.msra.mxu0 %v37
  %85 = vmatprep.subr.mxu0 %v36
  %86 = vmatpush1.msra.mxu0 %v35
  %87 = vmatprep.subr.mxu0 %v34
  %88 = vmatpush1.msra.mxu0 %v33
  %89 = vmatprep.subr.mxu0 %v32
  %90 = vmatpush1.msra.mxu0 %v31
  %91 = vmatprep.subr.mxu0 %v30
  %92 = vmatpush1.msra.mxu0 %v29
  %93 = vmatprep.subr.mxu0 %v28
  %94 = vmatpush1.msra.mxu0 %v27
  %95 = vmatprep.subr.mxu0 %v26
  %96 = vmatpush1.msra.mxu0 %v25
  %97 = vmatprep.subr.mxu0 %v24
  %98 = vmatpush1.msra.mxu0 %v23
  %99 = vmatprep.subr.mxu0 %v22
  %100 = vmatpush1.msra.mxu0 %v21
  %101 = vmatprep.subr.mxu0 %v20
  %102 = vmatpush1.msra.mxu0 %v19
  %103 = vmatprep.subr.mxu0 %v18
  %104 = vmatpush1.msra.mxu0 %v17
  %105 = vmatprep.subr.mxu0 %v16
  %106 = vmatpush1.msra.mxu0 %v15
  %107 = vmatprep.subr.mxu0 %v14
  %108 = vmatpush1.msra.mxu0 %v13
  %109 = vmatprep.subr.mxu0 %v76
  %110 = vmatpush2.msra.mxu0 %v75
  %111 = vmatprep.subr.mxu0 %v74
  %112 = vmatpush2.msra.mxu0 %v73
  %113 = vmatprep.subr.mxu0 %v72
  %114 = vmatpush2.msra.mxu0 %v71
  %115 = vmatprep.subr.mxu0 %v70
  %116 = vmatpush2.msra.mxu0 %v69
  %117 = vmatprep.subr.mxu0 %v68
  %118 = vmatpush2.msra.mxu0 %v67
  %119 = vmatprep.subr.mxu0 %v66
  %120 = vmatpush2.msra.mxu0 %v65
  %121 = vmatprep.subr.mxu0 %v64
  %122 = vmatpush2.msra.mxu0 %v63
  %123 = vmatprep.subr.mxu0 %v62
  %124 = vmatpush2.msra.mxu0 %v61
  %125 = vmatprep.subr.mxu0 %v60
  %126 = vmatpush2.msra.mxu0 %v59
  %127 = vmatprep.subr.mxu0 %v58
  %128 = vmatpush2.msra.mxu0 %v57
  %129 = vmatprep.subr.mxu0 %v56
  %130 = vmatpush2.msra.mxu0 %v55
  %131 = vmatprep.subr.mxu0 %v54
  %132 = vmatpush2.msra.mxu0 %v53
  %133 = vmatprep.subr.mxu0 %v52
  %134 = vmatpush2.msra.mxu0 %v51
  %135 = vmatprep.subr.mxu0 %v50
  %136 = vmatpush2.msra.mxu0 %v49
  %137 = vmatprep.subr.mxu0 %v48
  %138 = vmatpush2.msra.mxu0 %v47
  %139 = vmatprep.subr.mxu0 %v46
  %140 = vmatpush2.msra.mxu0 %v45
  %141 = vmatprep.mubr.f32.mxu0 %v12
  %142 = vmatmul.mubr.f32.gmra.mxu0 %v11
  %v143 = vpop.f32.mrf.mxu0
  %v144 = vadd.f32 0.0, %v143
  %v145 = vpop.f32.mrf.mxu0
  %v146 = vadd.f32 0.0, %v145
  %147 = vdwg.mxu0
  %148 = vst [vmem:[%s2] sm:$0xff] %v144
  %149 = vst [vmem:[%s2 + $0x8] sm:$0xff] %v146
  // Predicated region
  $region10: #{box_filter.1} parent=0 // pred_check
    _
  $region11: #{box_filter.1} parent=0 // pred_check_branch
    %151 = sbr.rel (0) target = $region13
  $region12: #{box_filter.1} parent=0 // pred_region
    _
  $region13: #{box_filter.1} parent=0 // pred_fallthru
    _
  // Predicated region
  $region14: #{box_filter.1} parent=0 // pred_check
    _
  $region15: #{box_filter.1} parent=0 // pred_check_branch
    %153 = sbr.rel (0) target = $region17
  $region16: #{box_filter.1} parent=0 // pred_region
    _
  $region17: #{box_filter.1} parent=0 // pred_fallthru
    _

</llo_original>
